<compile_context>
chip_gen: v7x
topology: tpu7x:2x2x1
jax: 0.10.0
libtpu: 0.0.40
codegen_flags: <defaults>
</compile_context>

<pallas_src>
import jax
import jax.numpy as jnp
from jax.experimental import pallas as pl
from jax.experimental.pallas import tpu as pltpu


# ---------------------------------------------------------------------------
# Fused kernel:
#   A_norm = D^{-1} (A + I)
#   h1 = relu(A_norm @ (x  @ W1bd + b1w))        x, h1, h2 are (N, B*C)
#   h2 = relu(A_norm @ (h1 @ W2bd + b2w))
# where W*bd are block-diagonal (kron(I_B, W)) so the batch stays fused in the
# lane axis with no in-kernel reshapes.
# ---------------------------------------------------------------------------
def _gcn_fused_kernel(x_ref, g_ref, w1_ref, b1_ref, w2_ref, b2_ref, o_ref):
    # --- in-kernel graph normalization: A_norm = D^{-1} (A + I) -------------
    g = g_ref[...]                                            # (N, N)
    n = g.shape[0]
    rows = jax.lax.broadcasted_iota(jnp.int32, (n, n), 0)
    cols = jax.lax.broadcasted_iota(jnp.int32, (n, n), 1)
    eye = jnp.where(rows == cols, jnp.ones_like(g), jnp.zeros_like(g))
    a = g + eye
    deg = jnp.sum(a, axis=-1, keepdims=True)                  # row degree
    inv = jnp.where(deg == 0.0, jnp.zeros_like(deg), 1.0 / deg)
    a_norm = inv * a                                          # diag(inv) @ a

    # --- layer 1 -------------------------------------------------------------
    x = x_ref[...]                                            # (N, B*in_c)
    h1 = jnp.dot(x, w1_ref[...], preferred_element_type=jnp.float32) + b1_ref[...]
    h1 = jnp.maximum(jnp.dot(a_norm, h1, preferred_element_type=jnp.float32), 0.0)

    # --- layer 2 -------------------------------------------------------------
    h2 = jnp.dot(h1, w2_ref[...], preferred_element_type=jnp.float32) + b2_ref[...]
    h2 = jnp.maximum(jnp.dot(a_norm, h2, preferred_element_type=jnp.float32), 0.0)

    o_ref[...] = h2.astype(o_ref.dtype)                       # (N, B*out_c)


def gcn_forward(flow_x, graph, w1, b1, w2, b2):
    """flow_x: [B, N, H, D] (viewed as [B, N, H*D]); graph: [N, N] (raw adjacency)."""
    B, N = flow_x.shape[0], flow_x.shape[1]
    x = flow_x.reshape(B, N, -1)
    in_c = x.shape[-1]
    hid_c = w1.shape[1]
    out_c = w2.shape[1]

    # Batch-fused, lane-dense layouts (done once in the wrapper, XLA handles it).
    x_wide = jnp.transpose(x, (1, 0, 2)).reshape(N, B * in_c)   # (N, B*in_c)
    eye_b = jnp.eye(B, dtype=w1.dtype)
    w1_wide = jnp.kron(eye_b, w1)                               # (B*in_c, B*hid_c)
    w2_wide = jnp.kron(eye_b, w2)                               # (B*hid_c, B*out_c)
    b1_wide = jnp.tile(b1, (1, B))                              # (1, B*hid_c)
    b2_wide = jnp.tile(b2, (1, B))                              # (1, B*out_c)

    vmem_spec = pl.BlockSpec(memory_space=pltpu.MemorySpace.VMEM)
    out_wide = pl.pallas_call(
        _gcn_fused_kernel,
        out_shape=jax.ShapeDtypeStruct((N, B * out_c), x.dtype),
        in_specs=[vmem_spec] * 6,
        out_specs=vmem_spec,
    )(x_wide, graph, w1_wide, b1_wide, w2_wide, b2_wide)

    # (N, B*out_c) -> (B, N, out_c) -> unsqueeze(2)
    out = out_wide.reshape(N, B, out_c).transpose(1, 0, 2)
    return out[:, :, None, :]


# ---------------------------------------------------------------------------
# Pure-JAX reference (mirrors the PyTorch forward) for a sanity check.
# ---------------------------------------------------------------------------
def gcn_reference(flow_x, graph, w1, b1, w2, b2):
    B, N = flow_x.shape[0], flow_x.shape[1]
    x = flow_x.reshape(B, N, -1)
    a = graph + jnp.eye(N, dtype=graph.dtype)
    deg = jnp.sum(a, axis=-1)
    inv = jnp.where(deg == 0.0, 0.0, 1.0 / deg)
    a_norm = jnp.diag(inv) @ a
    h1 = jnp.maximum(jnp.einsum("nm,bmc->bnc", a_norm, x @ w1 + b1), 0.0)
    h2 = jnp.maximum(jnp.einsum("nm,bmc->bnc", a_norm, h1 @ w2 + b2), 0.0)
    return h2[:, :, None, :]


if __name__ == "__main__":
    key = jax.random.PRNGKey(0)
    k_graph, k_x, k_w1, k_b1, k_w2, k_b2 = jax.random.split(key, 6)

    # Small shapes consistent with the module's forward:
    B, N, H, D = 2, 16, 1, 8           # flow_x: [B, N, H, D] -> in_c = H*D = 8
    in_c, hid_c, out_c = H * D, 32, 16

    # Deterministic synthetic inputs / parameters.
    graph = jax.random.bernoulli(k_graph, p=0.3, shape=(N, N)).astype(jnp.float32)
    flow_x = jax.random.normal(k_x, (B, N, H, D), dtype=jnp.float32)

    # nn.Linear-style init: U(-1/sqrt(fan_in), 1/sqrt(fan_in)); stored pre-transposed
    # as (in, out) so the kernel does x @ W directly.
    bnd1 = 1.0 / (in_c ** 0.5)
    w1 = jax.random.uniform(k_w1, (in_c, hid_c), jnp.float32, -bnd1, bnd1)
    b1 = jax.random.uniform(k_b1, (1, hid_c), jnp.float32, -bnd1, bnd1)
    bnd2 = 1.0 / (hid_c ** 0.5)
    w2 = jax.random.uniform(k_w2, (hid_c, out_c), jnp.float32, -bnd2, bnd2)
    b2 = jax.random.uniform(k_b2, (1, out_c), jnp.float32, -bnd2, bnd2)

    out = gcn_forward(flow_x, graph, w1, b1, w2, b2)
    out = jax.block_until_ready(out)

    ref = gcn_reference(flow_x, graph, w1, b1, w2, b2)
    assert out.shape == (B, N, 1, out_c), out.shape
    assert jnp.allclose(out, ref, atol=1e-5, rtol=1e-5), "mismatch vs reference"

    print("KERNEL_OK")
</pallas_src>

<mosaic_0001>
module attributes {stable_mosaic.version = 11 : i64} {
  func.func @_gcn_fused_kernel(%arg0: memref<16x16xf32, #tpu.memory_space<vmem>>, %arg1: memref<16x16xf32, #tpu.memory_space<vmem>>, %arg2: memref<16x64xf32, #tpu.memory_space<vmem>>, %arg3: memref<1x64xf32, #tpu.memory_space<vmem>>, %arg4: memref<64x32xf32, #tpu.memory_space<vmem>>, %arg5: memref<1x32xf32, #tpu.memory_space<vmem>>, %arg6: memref<16x32xf32, #tpu.memory_space<vmem>>) attributes {dimension_semantics = [], scalar_prefetch = 0 : i64, scratch_operands = 0 : i64, tpu.core_type = #tpu.core_type<tc>} {
    %c0 = arith.constant 0 : index
    %c0_0 = arith.constant 0 : index
    %0 = vector.load %arg1[%c0, %c0_0] : memref<16x16xf32, #tpu.memory_space<vmem>>, vector<16x16xf32>
    %1 = tpu.iota {dimensions = array<i32: 0>} : vector<16x16xi32>
    %2 = tpu.iota {dimensions = array<i32: 1>} : vector<16x16xi32>
    %3 = arith.cmpi eq, %1, %2 : vector<16x16xi32>
    %cst = arith.constant 1.000000e+00 : f32
    %4 = vector.broadcast %cst : f32 to vector<16x16xf32>
    %cst_1 = arith.constant 0.000000e+00 : f32
    %5 = vector.broadcast %cst_1 : f32 to vector<16x16xf32>
    %6 = arith.select %3, %4, %5 : vector<16x16xi1>, vector<16x16xf32>
    %7 = arith.addf %0, %6 : vector<16x16xf32>
    %cst_2 = arith.constant dense<0.000000e+00> : vector<16xf32>
    %8 = vector.multi_reduction <add>, %7, %cst_2 [1] : vector<16x16xf32> to vector<16xf32>
    %9 = vector.shape_cast %8 : vector<16xf32> to vector<16x1xf32>
    %cst_3 = arith.constant 0.000000e+00 : f32
    %10 = vector.broadcast %cst_3 : f32 to vector<16x1xf32>
    %11 = arith.cmpf oeq, %9, %10 : vector<16x1xf32>
    %cst_4 = arith.constant 0.000000e+00 : f32
    %12 = vector.broadcast %cst_4 : f32 to vector<16x1xf32>
    %cst_5 = arith.constant 1.000000e+00 : f32
    %13 = vector.broadcast %cst_5 : f32 to vector<16x1xf32>
    %14 = arith.divf %13, %9 : vector<16x1xf32>
    %15 = arith.select %11, %12, %14 : vector<16x1xi1>, vector<16x1xf32>
    %16 = vector.broadcast %15 : vector<16x1xf32> to vector<16x16xf32>
    %17 = arith.mulf %16, %7 : vector<16x16xf32>
    %c0_6 = arith.constant 0 : index
    %c0_7 = arith.constant 0 : index
    %18 = vector.load %arg0[%c0_6, %c0_7] : memref<16x16xf32, #tpu.memory_space<vmem>>, vector<16x16xf32>
    %c0_8 = arith.constant 0 : index
    %c0_9 = arith.constant 0 : index
    %19 = vector.load %arg2[%c0_8, %c0_9] : memref<16x64xf32, #tpu.memory_space<vmem>>, vector<16x64xf32>
    %cst_10 = arith.constant dense<0.000000e+00> : vector<16x64xf32>
    %20 = tpu.matmul %18, %19, %cst_10 {dimension_numbers = #tpu.dot_dimension_numbers<[1], [0], [0], [1], [0, 0, 1, 1], [], []>} : vector<16x16xf32>, vector<16x64xf32>, vector<16x64xf32> -> vector<16x64xf32>
    %c0_11 = arith.constant 0 : index
    %c0_12 = arith.constant 0 : index
    %21 = vector.load %arg3[%c0_11, %c0_12] : memref<1x64xf32, #tpu.memory_space<vmem>>, vector<1x64xf32>
    %22 = vector.broadcast %21 : vector<1x64xf32> to vector<16x64xf32>
    %23 = arith.addf %20, %22 : vector<16x64xf32>
    %cst_13 = arith.constant dense<0.000000e+00> : vector<16x64xf32>
    %24 = tpu.matmul %17, %23, %cst_13 {dimension_numbers = #tpu.dot_dimension_numbers<[1], [0], [0], [1], [0, 0, 1, 1], [], []>} : vector<16x16xf32>, vector<16x64xf32>, vector<16x64xf32> -> vector<16x64xf32>
    %cst_14 = arith.constant 0.000000e+00 : f32
    %25 = vector.broadcast %cst_14 : f32 to vector<16x64xf32>
    %26 = arith.maximumf %24, %25 : vector<16x64xf32>
    %c0_15 = arith.constant 0 : index
    %c0_16 = arith.constant 0 : index
    %27 = vector.load %arg4[%c0_15, %c0_16] : memref<64x32xf32, #tpu.memory_space<vmem>>, vector<64x32xf32>
    %cst_17 = arith.constant dense<0.000000e+00> : vector<16x32xf32>
    %28 = tpu.matmul %26, %27, %cst_17 {dimension_numbers = #tpu.dot_dimension_numbers<[1], [0], [0], [1], [0, 0, 1, 1], [], []>} : vector<16x64xf32>, vector<64x32xf32>, vector<16x32xf32> -> vector<16x32xf32>
    %c0_18 = arith.constant 0 : index
    %c0_19 = arith.constant 0 : index
    %29 = vector.load %arg5[%c0_18, %c0_19] : memref<1x32xf32, #tpu.memory_space<vmem>>, vector<1x32xf32>
    %30 = vector.broadcast %29 : vector<1x32xf32> to vector<16x32xf32>
    %31 = arith.addf %28, %30 : vector<16x32xf32>
    %cst_20 = arith.constant dense<0.000000e+00> : vector<16x32xf32>
    %32 = tpu.matmul %17, %31, %cst_20 {dimension_numbers = #tpu.dot_dimension_numbers<[1], [0], [0], [1], [0, 0, 1, 1], [], []>} : vector<16x16xf32>, vector<16x32xf32>, vector<16x32xf32> -> vector<16x32xf32>
    %cst_21 = arith.constant 0.000000e+00 : f32
    %33 = vector.broadcast %cst_21 : f32 to vector<16x32xf32>
    %34 = arith.maximumf %32, %33 : vector<16x32xf32>
    %c0_22 = arith.constant 0 : index
    %c0_23 = arith.constant 0 : index
    %35 = vector.load %arg6[%c0_22, %c0_23] : memref<16x32xf32, #tpu.memory_space<vmem>>, vector<16x32xf32>
    tpu.vector_store %arg6[%c0_22, %c0_23], %34 {strides = array<i32>} : memref<16x32xf32, #tpu.memory_space<vmem>>, vector<16x32xf32>,
    return
  }
}

</mosaic_0001>

<llo_original>
// kernel: tpu_custom_call.1
$region0: #{tpu_custom_call.1}
  #allocation0 [shape = 'u32[]', space=smem, size = 0x4, offset = 0x4, fixed_abs, tag = 'smem constant byte address 0x4 - core index']
  #allocation1 [shape = 'u32[144,128]{1,0:T(1,128)}', space=vmem, size = 0x12000, scoped, tag = 'internal scratch']
  %s0 = inlined_call_operand.vmem [shape: f32[16,16], index: 0, kind: input, shape index: {}]
  %s1 = inlined_call_operand.vmem [shape: f32[16,16], index: 1, kind: input, shape index: {}]
  %s2 = inlined_call_operand.vmem [shape: f32[16,64], index: 2, kind: input, shape index: {}]
  %s3 = inlined_call_operand.vmem [shape: f32[1,64], index: 3, kind: input, shape index: {}]
  %s4 = inlined_call_operand.vmem [shape: f32[64,32], index: 4, kind: input, shape index: {}]
  %s5 = inlined_call_operand.vmem [shape: f32[1,32], index: 5, kind: input, shape index: {}]
  %s6 = inlined_call_operand.hbm [shape: f32[16,32], index: 6, kind: output, shape index: {}]
  %s7 = sld [smem:[#allocation0]]
  $region34: #{tpu_custom_call.1} parent=0
    _
  %s9 = ssub.s32 1, %s7
  %s10 = scalar_select 0, %s9, %s7
  $region1: #{tpu_custom_call.1} parent=0
    #allocation2 [shape = 'u8[8192]{0}', space=vmem, size = 0x2000, scoped, tag = 'output window, operand 0, single buffered']
    #allocation3 [shape = 's32[1]{0}', space=sflag, size = 0x4, scoped, tag = 'scoped memory for tpu_custom_call.1']
    %11 = vsyncpa [#allocation3], 0
    // Predicated region
    $region2: #{tpu_custom_call.1} parent=1 // pred_check
      _
    $region3: #{tpu_custom_call.1} parent=1 // pred_check_branch
      %13 = sbr.rel (0) target = $region5
    $region4: #{tpu_custom_call.1} parent=1 // pred_region
      _
    $region5: #{tpu_custom_call.1} parent=1 // pred_fallthru
      _
    // Predicated region
    $region6: #{tpu_custom_call.1} parent=1 // pred_check
      _
    $region7: #{tpu_custom_call.1} parent=1 // pred_check_branch
      %15 = sbr.rel (0) target = $region9
    $region8: #{tpu_custom_call.1} parent=1 // pred_region
      _
    $region9: #{tpu_custom_call.1} parent=1 // pred_fallthru
      _
    // Predicated region
    $region10: #{tpu_custom_call.1} parent=1 // pred_check
      _
    $region11: #{tpu_custom_call.1} parent=1 // pred_check_branch
      %17 = sbr.rel (0) target = $region13
    $region12: #{tpu_custom_call.1} parent=1 // pred_region
      _
    $region13: #{tpu_custom_call.1} parent=1 // pred_fallthru
      _
    // Predicated region
    $region14: #{tpu_custom_call.1} parent=1 // pred_check
      _
    $region15: #{tpu_custom_call.1} parent=1 // pred_check_branch
      %19 = sbr.rel (0) target = $region17
    $region16: #{tpu_custom_call.1} parent=1 // pred_region
      _
    $region17: #{tpu_custom_call.1} parent=1 // pred_fallthru
      _
    // Predicated region
    $region18: #{tpu_custom_call.1} parent=1 // pred_check
      _
    $region19: #{tpu_custom_call.1} parent=1 // pred_check_branch
      %21 = sbr.rel (0) target = $region21
    $region20: #{tpu_custom_call.1} parent=1 // pred_region
      _
    $region21: #{tpu_custom_call.1} parent=1 // pred_fallthru
      _
    // Predicated region
    $region22: #{tpu_custom_call.1} parent=1 // pred_check
      _
    $region23: #{tpu_custom_call.1} parent=1 // pred_check_branch
      %23 = sbr.rel (0) target = $region25
    $region24: #{tpu_custom_call.1} parent=1 // pred_region
      _
    $region25: #{tpu_custom_call.1} parent=1 // pred_fallthru
      _
    %v24 = vld [vmem:[%s1] sm:$0xff]
    %v25 = vld [vmem:[%s1 + $0x8] sm:$0xff]
    %v26 = vlaneseq
    %v27 = vshrl.u32 %v26, 7
    %v28 = vadd.s32 %v27, 8
    %v29 = vlaneseq
    %v30 = vand.u32 %v29, 127
    %vm31 = vcmp.eq.s32.totalorder %v27, %v30
    %vm32 = vcmp.eq.s32.totalorder %v28, %v30
    %v33 = vsel %vm31, 1.0, 0.0
    %v34 = vsel %vm32, 1.0, 0.0
    %v35 = vadd.f32 %v24, %v33
    %v36 = vadd.f32 %v25, %v34
    %vm37 = vcmask 130048
    %v38 = vsel %vm37, %v35, 0.0
    %39 = vadd.xlane.f32.xlu0 %v38
    %v40 = vpop.xlane.xlu0 %39
    %v41 = vsel %vm37, %v36, 0.0
    %42 = vadd.xlane.f32.xlu0 %v41
    %v43 = vpop.xlane.xlu0 %42
    %vm44 = vcmp.eq.f32.partialorder %v40, 0.0
    %vm45 = vcmp.eq.f32.partialorder %v43, 0.0
    %v46 = vrcp.pop %v40
    %v47 = vmul.f32 1.0, %v46
    %v48 = vrcp.pop %v43
    %v49 = vmul.f32 1.0, %v48
    %v50 = vsel %vm44, 0.0, %v47
    %v51 = vsel %vm45, 0.0, %v49
    %v52 = vmul.f32 %v50, %v35
    %v53 = vmul.f32 %v51, %v36
    %v54 = vld [vmem:[%s0] sm:$0xff]
    %v55 = vld [vmem:[%s0 + $0x8] sm:$0xff]
    %v56 = vld [vmem:[%s2] sm:$0xff]
    %v57 = vld [vmem:[%s2 + $0x8] sm:$0xff]
    %v58 = vld [vmem:[%s3] sm:$0x1]
    %v60 = vlaneseq
    %v61 = vshrl.u32 %v60, 7
    %v62 = vsub.s32 0, %v61
    %v63 = vrot.slane %v58, %v62
    %v66 = vsel %vm37, %v54, 0
    %v69 = vsel %vm37, %v55, 0
    %71 = vmatprep.subr.mxu0 0.0
    %72 = vmatpush1.msra.mxu0 %v56
    %73 = vmatprep.subr.mxu0 0.0
    %74 = vmatpush1.msra.mxu0 %v57
    %75 = vmatprep.subr.mxu0 0.0
    %76 = vmatpush1.msra.mxu0 0.0
    %77 = vmatprep.subr.mxu0 0.0
    %78 = vmatpush1.msra.mxu0 0.0
    %79 = vmatprep.subr.mxu0 0.0
    %80 = vmatpush1.msra.mxu0 0.0
    %81 = vmatprep.subr.mxu0 0.0
    %82 = vmatpush1.msra.mxu0 0.0
    %83 = vmatprep.subr.mxu0 0.0
    %84 = vmatpush1.msra.mxu0 0.0
    %85 = vmatprep.subr.mxu0 0.0
    %86 = vmatpush1.msra.mxu0 0.0
    %87 = vmatprep.subr.mxu0 0.0
    %88 = vmatpush1.msra.mxu0 0.0
    %89 = vmatprep.subr.mxu0 0.0
    %90 = vmatpush1.msra.mxu0 0.0
    %91 = vmatprep.subr.mxu0 0.0
    %92 = vmatpush1.msra.mxu0 0.0
    %93 = vmatprep.subr.mxu0 0.0
    %94 = vmatpush1.msra.mxu0 0.0
    %95 = vmatprep.subr.mxu0 0.0
    %96 = vmatpush1.msra.mxu0 0.0
    %97 = vmatprep.subr.mxu0 0.0
    %98 = vmatpush1.msra.mxu0 0.0
    %99 = vmatprep.subr.mxu0 0.0
    %100 = vmatpush1.msra.mxu0 0.0
    %101 = vmatprep.subr.mxu0 0.0
    %102 = vmatpush1.msra.mxu0 0.0
    %103 = vmatprep.subr.mxu0 0.0
    %104 = vmatpush1.msra.mxu0 0.0
    %105 = vmatprep.subr.mxu0 0.0
    %106 = vmatpush1.msra.mxu0 0.0
    %107 = vmatprep.subr.mxu0 0.0
    %108 = vmatpush1.msra.mxu0 0.0
    %109 = vmatprep.subr.mxu0 0.0
    %110 = vmatpush1.msra.mxu0 0.0
    %111 = vmatprep.subr.mxu0 0.0
    %112 = vmatpush1.msra.mxu0 0.0
    %113 = vmatprep.subr.mxu0 0.0
    %114 = vmatpush1.msra.mxu0 0.0
    %115 = vmatprep.subr.mxu0 0.0
    %116 = vmatpush1.msra.mxu0 0.0
    %117 = vmatprep.subr.mxu0 0.0
    %118 = vmatpush1.msra.mxu0 0.0
    %119 = vmatprep.subr.mxu0 0.0
    %120 = vmatpush1.msra.mxu0 0.0
    %121 = vmatprep.subr.mxu0 0.0
    %122 = vmatpush1.msra.mxu0 0.0
    %123 = vmatprep.subr.mxu0 0.0
    %124 = vmatpush1.msra.mxu0 0.0
    %125 = vmatprep.subr.mxu0 0.0
    %126 = vmatpush1.msra.mxu0 0.0
    %127 = vmatprep.subr.mxu0 0.0
    %128 = vmatpush1.msra.mxu0 0.0
    %129 = vmatprep.subr.mxu0 0.0
    %130 = vmatpush1.msra.mxu0 0.0
    %131 = vmatprep.subr.mxu0 0.0
    %132 = vmatpush1.msra.mxu0 0.0
    %133 = vmatprep.subr.mxu0 0.0
    %134 = vmatpush1.msra.mxu0 0.0
    %135 = vmatprep.mubr.f32.mxu0 0.0
    %136 = vmatmul.mubr.f32.gmra.mrb[0].mxu0 %v66
    %v137 = vpop.f32.mrb[0].mxu0
    %v138 = vadd.f32 %v63, %v137
    %v139 = vpop.f32.mrb[0].mxu0
    %140 = vmatprep.mubr.f32.mxu0 0.0
    %141 = vmatmul.mubr.f32.gmra.mrb[0].mxu0 %v69
    %v142 = vpop.f32.mrb[0].mxu0
    %v143 = vadd.f32 %v63, %v142
    %v144 = vpop.f32.mrb[0].mxu0
    %145 = vdwg.mxu0
    %v147 = vsel %vm37, %v52, 0
    %v150 = vsel %vm37, %v53, 0
    %152 = vmatprep.subr.mxu0 0.0
    %153 = vmatpush1.msra.mxu0 %v138
    %154 = vmatprep.subr.mxu0 0.0
    %155 = vmatpush1.msra.mxu0 %v143
    %156 = vmatprep.subr.mxu0 0.0
    %157 = vmatpush1.msra.mxu0 0.0
    %158 = vmatprep.subr.mxu0 0.0
    %159 = vmatpush1.msra.mxu0 0.0
    %160 = vmatprep.subr.mxu0 0.0
    %161 = vmatpush1.msra.mxu0 0.0
    %162 = vmatprep.subr.mxu0 0.0
    %163 = vmatpush1.msra.mxu0 0.0
    %164 = vmatprep.subr.mxu0 0.0
    %165 = vmatpush1.msra.mxu0 0.0
    %166 = vmatprep.subr.mxu0 0.0
    %167 = vmatpush1.msra.mxu0 0.0
    %168 = vmatprep.subr.mxu0 0.0
    %169 = vmatpush1.msra.mxu0 0.0
    %170 = vmatprep.subr.mxu0 0.0
    %171 = vmatpush1.msra.mxu0 0.0
    %172 = vmatprep.subr.mxu0 0.0
    %173 = vmatpush1.msra.mxu0 0.0
    %174 = vmatprep.subr.mxu0 0.0
    %175 = vmatpush1.msra.mxu0 0.0
    %176 = vmatprep.subr.mxu0 0.0
    %177 = vmatpush1.msra.mxu0 0.0
    %178 = vmatprep.subr.mxu0 0.0
    %179 = vmatpush1.msra.mxu0 0.0
    %180 = vmatprep.subr.mxu0 0.0
    %181 = vmatpush1.msra.mxu0 0.0
    %182 = vmatprep.subr.mxu0 0.0
    %183 = vmatpush1.msra.mxu0 0.0
    %184 = vmatprep.subr.mxu0 0.0
    %185 = vmatpush1.msra.mxu0 0.0
    %186 = vmatprep.subr.mxu0 0.0
    %187 = vmatpush1.msra.mxu0 0.0
    %188 = vmatprep.subr.mxu0 0.0
    %189 = vmatpush1.msra.mxu0 0.0
    %190 = vmatprep.subr.mxu0 0.0
    %191 = vmatpush1.msra.mxu0 0.0
    %192 = vmatprep.subr.mxu0 0.0
    %193 = vmatpush1.msra.mxu0 0.0
    %194 = vmatprep.subr.mxu0 0.0
    %195 = vmatpush1.msra.mxu0 0.0
    %196 = vmatprep.subr.mxu0 0.0
    %197 = vmatpush1.msra.mxu0 0.0
    %198 = vmatprep.subr.mxu0 0.0
    %199 = vmatpush1.msra.mxu0 0.0
    %200 = vmatprep.subr.mxu0 0.0
    %201 = vmatpush1.msra.mxu0 0.0
    %202 = vmatprep.subr.mxu0 0.0
    %203 = vmatpush1.msra.mxu0 0.0
    %204 = vmatprep.subr.mxu0 0.0
    %205 = vmatpush1.msra.mxu0 0.0
    %206 = vmatprep.subr.mxu0 0.0
    %207 = vmatpush1.msra.mxu0 0.0
    %208 = vmatprep.subr.mxu0 0.0
    %209 = vmatpush1.msra.mxu0 0.0
    %210 = vmatprep.subr.mxu0 0.0
    %211 = vmatpush1.msra.mxu0 0.0
    %212 = vmatprep.subr.mxu0 0.0
    %213 = vmatpush1.msra.mxu0 0.0
    %214 = vmatprep.subr.mxu0 0.0
    %215 = vmatpush1.msra.mxu0 0.0
    %216 = vmatprep.mubr.f32.mxu0 0.0
    %217 = vmatmul.mubr.f32.gmra.mrb[0].mxu0 %v147
    %v218 = vpop.f32.mrb[0].mxu0
    %v219 = vadd.f32 0.0, %v218
    %v220 = vpop.f32.mrb[0].mxu0
    %221 = vmatprep.mubr.f32.mxu0 0.0
    %222 = vmatmul.mubr.f32.gmra.mrb[0].mxu0 %v150
    %v223 = vpop.f32.mrb[0].mxu0
    %v224 = vadd.f32 0.0, %v223
    %v225 = vpop.f32.mrb[0].mxu0
    %226 = vdwg.mxu0
    %v227 = vmax.f32 %v219, 0.0
    %v228 = vmax.f32 %v224, 0.0
    %v229 = vld [vmem:[%s4] sm:$0xff]
    %v230 = vld [vmem:[%s4 + $0x8] sm:$0xff]
    %v231 = vld [vmem:[%s4 + $0x10] sm:$0xff]
    %v232 = vld [vmem:[%s4 + $0x18] sm:$0xff]
    %v233 = vld [vmem:[%s4 + $0x20] sm:$0xff]
    %v234 = vld [vmem:[%s4 + $0x28] sm:$0xff]
    %v235 = vld [vmem:[%s4 + $0x30] sm:$0xff]
    %v236 = vld [vmem:[%s4 + $0x38] sm:$0xff]
    %v237 = vld [vmem:[%s5] sm:$0x1]
    %v239 = vlaneseq
    %v240 = vshrl.u32 %v239, 7
    %v241 = vsub.s32 0, %v240
    %v242 = vrot.slane %v237, %v241
    %vm244 = vcmask 523264
    %v246 = vsel %vm244, %v227, 0
    %v249 = vsel %vm244, %v228, 0
    %251 = vmatprep.subr.mxu0 0.0
    %252 = vmatpush1.msra.mxu0 %v229
    %253 = vmatprep.subr.mxu0 0.0
    %254 = vmatpush1.msra.mxu0 %v230
    %255 = vmatprep.subr.mxu0 0.0
    %256 = vmatpush1.msra.mxu0 %v231
    %257 = vmatprep.subr.mxu0 0.0
    %258 = vmatpush1.msra.mxu0 %v232
    %259 = vmatprep.subr.mxu0 0.0
    %260 = vmatpush1.msra.mxu0 %v233
    %261 = vmatprep.subr.mxu0 0.0
    %262 = vmatpush1.msra.mxu0 %v234
    %263 = vmatprep.subr.mxu0 0.0
    %264 = vmatpush1.msra.mxu0 %v235
    %265 = vmatprep.subr.mxu0 0.0
    %266 = vmatpush1.msra.mxu0 %v236
    %267 = vmatprep.subr.mxu0 0.0
    %268 = vmatpush1.msra.mxu0 0.0
    %269 = vmatprep.subr.mxu0 0.0
    %270 = vmatpush1.msra.mxu0 0.0
    %271 = vmatprep.subr.mxu0 0.0
    %272 = vmatpush1.msra.mxu0 0.0
    %273 = vmatprep.subr.mxu0 0.0
    %274 = vmatpush1.msra.mxu0 0.0
    %275 = vmatprep.subr.mxu0 0.0
    %276 = vmatpush1.msra.mxu0 0.0
    %277 = vmatprep.subr.mxu0 0.0
    %278 = vmatpush1.msra.mxu0 0.0
    %279 = vmatprep.subr.mxu0 0.0
    %280 = vmatpush1.msra.mxu0 0.0
    %281 = vmatprep.subr.mxu0 0.0
    %282 = vmatpush1.msra.mxu0 0.0
    %283 = vmatprep.subr.mxu0 0.0
    %284 = vmatpush1.msra.mxu0 0.0
    %285 = vmatprep.subr.mxu0 0.0
    %286 = vmatpush1.msra.mxu0 0.0
    %287 = vmatprep.subr.mxu0 0.0
    %288 = vmatpush1.msra.mxu0 0.0
    %289 = vmatprep.subr.mxu0 0.0
    %290 = vmatpush1.msra.mxu0 0.0
    %291 = vmatprep.subr.mxu0 0.0
    %292 = vmatpush1.msra.mxu0 0.0
    %293 = vmatprep.subr.mxu0 0.0
    %294 = vmatpush1.msra.mxu0 0.0
    %295 = vmatprep.subr.mxu0 0.0
    %296 = vmatpush1.msra.mxu0 0.0
    %297 = vmatprep.subr.mxu0 0.0
    %298 = vmatpush1.msra.mxu0 0.0
    %299 = vmatprep.subr.mxu0 0.0
    %300 = vmatpush1.msra.mxu0 0.0
    %301 = vmatprep.subr.mxu0 0.0
    %302 = vmatpush1.msra.mxu0 0.0
    %303 = vmatprep.subr.mxu0 0.0
    %304 = vmatpush1.msra.mxu0 0.0
    %305 = vmatprep.subr.mxu0 0.0
    %306 = vmatpush1.msra.mxu0 0.0
    %307 = vmatprep.subr.mxu0 0.0
    %308 = vmatpush1.msra.mxu0 0.0
    %309 = vmatprep.subr.mxu0 0.0
    %310 = vmatpush1.msra.mxu0 0.0
    %311 = vmatprep.subr.mxu0 0.0
    %312 = vmatpush1.msra.mxu0 0.0
    %313 = vmatprep.subr.mxu0 0.0
    %314 = vmatpush1.msra.mxu0 0.0
    %315 = vmatprep.mubr.f32.mxu0 0.0
    %316 = vmatmul.mubr.f32.gmra.mrb[0].mxu0 %v246
    %v317 = vpop.f32.mrb[0].mxu0
    %v318 = vadd.f32 %v242, %v317
    %v319 = vpop.f32.mrb[0].mxu0
    %320 = vmatprep.mubr.f32.mxu0 0.0
    %321 = vmatmul.mubr.f32.gmra.mrb[0].mxu0 %v249
    %v322 = vpop.f32.mrb[0].mxu0
    %v323 = vadd.f32 %v242, %v322
    %v324 = vpop.f32.mrb[0].mxu0
    %325 = vdwg.mxu0
    %326 = vmatprep.subr.mxu0 0.0
    %327 = vmatpush1.msra.mxu0 %v318
    %328 = vmatprep.subr.mxu0 0.0
    %329 = vmatpush1.msra.mxu0 %v323
    %330 = vmatprep.subr.mxu0 0.0
    %331 = vmatpush1.msra.mxu0 0.0
    %332 = vmatprep.subr.mxu0 0.0
    %333 = vmatpush1.msra.mxu0 0.0
    %334 = vmatprep.subr.mxu0 0.0
    %335 = vmatpush1.msra.mxu0 0.0
    %336 = vmatprep.subr.mxu0 0.0
    %337 = vmatpush1.msra.mxu0 0.0
    %338 = vmatprep.subr.mxu0 0.0
    %339 = vmatpush1.msra.mxu0 0.0
    %340 = vmatprep.subr.mxu0 0.0
    %341 = vmatpush1.msra.mxu0 0.0
    %342 = vmatprep.subr.mxu0 0.0
    %343 = vmatpush1.msra.mxu0 0.0
    %344 = vmatprep.subr.mxu0 0.0
    %345 = vmatpush1.msra.mxu0 0.0
    %346 = vmatprep.subr.mxu0 0.0
    %347 = vmatpush1.msra.mxu0 0.0
    %348 = vmatprep.subr.mxu0 0.0
    %349 = vmatpush1.msra.mxu0 0.0
    %350 = vmatprep.subr.mxu0 0.0
    %351 = vmatpush1.msra.mxu0 0.0
    %352 = vmatprep.subr.mxu0 0.0
    %353 = vmatpush1.msra.mxu0 0.0
    %354 = vmatprep.subr.mxu0 0.0
    %355 = vmatpush1.msra.mxu0 0.0
    %356 = vmatprep.subr.mxu0 0.0
    %357 = vmatpush1.msra.mxu0 0.0
    %358 = vmatprep.subr.mxu0 0.0
    %359 = vmatpush1.msra.mxu0 0.0
    %360 = vmatprep.subr.mxu0 0.0
    %361 = vmatpush1.msra.mxu0 0.0
    %362 = vmatprep.subr.mxu0 0.0
    %363 = vmatpush1.msra.mxu0 0.0
    %364 = vmatprep.subr.mxu0 0.0
    %365 = vmatpush1.msra.mxu0 0.0
    %366 = vmatprep.subr.mxu0 0.0
    %367 = vmatpush1.msra.mxu0 0.0
    %368 = vmatprep.subr.mxu0 0.0
    %369 = vmatpush1.msra.mxu0 0.0
    %370 = vmatprep.subr.mxu0 0.0
    %371 = vmatpush1.msra.mxu0 0.0
    %372 = vmatprep.subr.mxu0 0.0
    %373 = vmatpush1.msra.mxu0 0.0
    %374 = vmatprep.subr.mxu0 0.0
    %375 = vmatpush1.msra.mxu0 0.0
    %376 = vmatprep.subr.mxu0 0.0
    %377 = vmatpush1.msra.mxu0 0.0
    %378 = vmatprep.subr.mxu0 0.0
    %379 = vmatpush1.msra.mxu0 0.0
    %380 = vmatprep.subr.mxu0 0.0
    %381 = vmatpush1.msra.mxu0 0.0
    %382 = vmatprep.subr.mxu0 0.0
    %383 = vmatpush1.msra.mxu0 0.0
    %384 = vmatprep.subr.mxu0 0.0
    %385 = vmatpush1.msra.mxu0 0.0
    %386 = vmatprep.subr.mxu0 0.0
    %387 = vmatpush1.msra.mxu0 0.0
    %388 = vmatprep.subr.mxu0 0.0
    %389 = vmatpush1.msra.mxu0 0.0
    %390 = vmatprep.mubr.f32.mxu0 0.0
    %391 = vmatmul.mubr.f32.gmra.mrb[0].mxu0 %v147
    %v392 = vpop.f32.mrb[0].mxu0
    %v393 = vadd.f32 0.0, %v392
    %v394 = vpop.f32.mrb[0].mxu0
    %395 = vmatprep.mubr.f32.mxu0 0.0
    %396 = vmatmul.mubr.f32.gmra.mrb[0].mxu0 %v150
    %v397 = vpop.f32.mrb[0].mxu0
    %v398 = vadd.f32 0.0, %v397
    %v399 = vpop.f32.mrb[0].mxu0
    %400 = vdwg.mxu0
    %v401 = vmax.f32 %v393, 0.0
    %v402 = vmax.f32 %v398, 0.0
    %vm403 = vcmask 261120
    %404 = vst.msk [vmem:[#allocation2] sm:$0xff] %vm403, %v401
    %405 = vst.msk [vmem:[#allocation2 + $0x8] sm:$0xff] %vm403, %v402
    // Predicated region
    $region26: #{tpu_custom_call.1} parent=1 // pred_check
      _
    $region27: #{tpu_custom_call.1} parent=1 // pred_check_branch
      %407 = sbr.rel (0) target = $region29
    $region28: #{tpu_custom_call.1} parent=1 // pred_region
      %s409 = ssub.s32 256, 256
      %410 = vsyncadd [#allocation3], %s409
      %s411 = sshll.u32 [#allocation2], 4
      %s412 = int_to_ptr.vmem [resolvable:$true] %s411
      %417 = dma.vmem_to_hbm [thread:$0]  %s412, 256, %s6, [#allocation3], 128, 128, 8
    $region29: #{tpu_custom_call.1} parent=1 // pred_fallthru
      _
    // Predicated region
    $region30: #{tpu_custom_call.1} parent=1 // pred_check
      _
    $region31: #{tpu_custom_call.1} parent=1 // pred_check_branch
      %419 = sbr.rel (0) target = $region33
    $region32: #{tpu_custom_call.1} parent=1 // pred_region
      %420 = dma.done [#allocation3], 256
    $region33: #{tpu_custom_call.1} parent=1 // pred_fallthru
      _
    %421 = vsyncpa [#allocation3], 1

</llo_original>
